<compile_context>
chip_gen: v7x
topology: tpu7x:2x2x1
jax: 0.10.0
libtpu: 0.0.40
codegen_flags: <defaults>
</compile_context>

<pallas_src>
import functools
import numpy as np
import jax
import jax.numpy as jnp
from jax.experimental import pallas as pl
from jax.experimental.pallas import tpu as pltpu


def _round_up(x, m):
    return (x + m - 1) // m * m


# ----------------------------------------------------------------------------
# Pallas kernel: three lane-dense MXU matmuls (conv-as-matmul, fc1, fc2) with
# f32 accumulation.  Biases and the ext term are pre-folded into the weights.
# Shapes per grid step (TB = batch tile):
#   x (TB, KIN)  -> conv (TB, NCONV) -> h (TB, NF1) -> out (TB, NCLS)
# ----------------------------------------------------------------------------
def convnet_kernel(x_ref, wconv_ref, w1_ref, w2_ref, out_ref):
    cdt = w1_ref.dtype
    conv = jnp.dot(x_ref[...], wconv_ref[...],
                   preferred_element_type=jnp.float32)
    conv = jnp.maximum(conv, 0.0).astype(cdt)          # ReLU (f32), cast for MXU
    h = jnp.dot(conv, w1_ref[...], preferred_element_type=jnp.float32)
    h = jnp.maximum(h, 0.0).astype(cdt)
    # TODO(synk): F.dropout is the eval-mode identity here (training=False);
    # training-mode stochastic masking is not implemented.
    out_ref[...] = jnp.dot(h, w2_ref[...], preferred_element_type=jnp.float32)


# ----------------------------------------------------------------------------
# One-time (model-load) parameter re-layout into kernel-friendly padded slabs.
# Column layouts (all padded to multiples of 128):
#   input slab cols : [0..K1-1]=image  [K1]=1.0  [K1+1..K1+kext]=ext  rest=0
#   conv cols       : [0..nf-1]=conv(f,h,w order)  [nf]=constant 1
#                     [nf+1..nf+kext]=+ext  [nf+1+kext..nf+2kext]=-ext  rest=0
#   hidden cols     : [0..nfc1-1]=fc1 units  [NF1-1]=constant 1 (fc2 bias)
# ----------------------------------------------------------------------------
def prepare_params(p, input_shape, compute_dtype=jnp.bfloat16):
    C_in, H, W = input_shape
    conv_w = np.asarray(p['conv_w'], np.float32)
    conv_b = np.asarray(p['conv_b'], np.float32)
    fc1_w = np.asarray(p['fc1_w'], np.float32)
    fc1_b = np.asarray(p['fc1_b'], np.float32)
    fc2_w = np.asarray(p['fc2_w'], np.float32)
    fc2_b = np.asarray(p['fc2_b'], np.float32)

    F, _, KH, KW = conv_w.shape
    P = H * W
    K1 = C_in * H * W
    nf = F * P                        # num_flatten
    nfc1 = fc1_w.shape[0]
    ncls = fc2_w.shape[0]
    kext = fc1_w.shape[1] - nf        # 1 + dim_emb_theta + dim_emb_phi

    KIN = _round_up(K1 + 1 + kext, 128)
    NCONV = _round_up(nf + 1 + 2 * kext, 128)
    NF1 = _round_up(nfc1 + 1, 128)
    NCLS = _round_up(ncls, 128)

    IN_ONE = K1                       # constant-1 input column
    IN_EXT = K1 + 1                   # first ext input column
    COL_ONE = nf                      # constant-1 conv column (carries fc1_b)
    COL_EP = nf + 1                   # +ext pass-through conv columns
    COL_EN = nf + 1 + kext            # -ext pass-through conv columns
    H_ONE = NF1 - 1                   # constant-1 hidden column (carries fc2_b)
    assert COL_EN + kext <= NCONV and nfc1 <= H_ONE

    # --- conv folded to a dense matrix: row = flat input (c*H*W + h*W + w),
    #     col = PyTorch flatten of conv output (f*P + oh*W + ow).
    ph, pw = (KH - 1) // 2, (KW - 1) // 2
    wconv = np.zeros((KIN, NCONV), np.float32)
    for f in range(F):
        for c in range(C_in):
            for di in range(KH):
                for dj in range(KW):
                    v = conv_w[f, c, di, dj]
                    if v == 0.0:
                        continue
                    for oh in range(H):
                        ih = oh + di - ph
                        if ih < 0 or ih >= H:
                            continue
                        for ow in range(W):
                            iw = ow + dj - pw
                            if iw < 0 or iw >= W:
                                continue
                            wconv[c * H * W + ih * W + iw,
                                  f * P + oh * W + ow] += v
        wconv[IN_ONE, f * P:(f + 1) * P] = conv_b[f]    # conv bias via ones col
    wconv[IN_ONE, COL_ONE] = 1.0                        # constant-1 conv column
    for j in range(kext):                               # ext = relu(e)-relu(-e)
        wconv[IN_EXT + j, COL_EP + j] = 1.0
        wconv[IN_EXT + j, COL_EN + j] = -1.0

    # --- fc1 over [conv image | 1 | +ext | -ext], fc2 bias carrier column ---
    w1 = np.zeros((NCONV, NF1), np.float32)
    w1[:nf, :nfc1] = fc1_w[:, :nf].T
    w1[COL_ONE, :nfc1] = fc1_b
    w1[COL_EP:COL_EP + kext, :nfc1] = fc1_w[:, nf:].T
    w1[COL_EN:COL_EN + kext, :nfc1] = -fc1_w[:, nf:].T
    w1[COL_ONE, H_ONE] = 1.0

    # --- fc2 ---
    w2 = np.zeros((NF1, NCLS), np.float32)
    w2[:nfc1, :ncls] = fc2_w.T
    w2[H_ONE, :ncls] = fc2_b

    return {
        'wconv': jnp.asarray(wconv, dtype=compute_dtype),
        'w1': jnp.asarray(w1, dtype=compute_dtype),
        'w2': jnp.asarray(w2, dtype=compute_dtype),
        'emb_theta': jnp.asarray(np.asarray(p['emb_theta'], np.float32)),
        'emb_phi': jnp.asarray(np.asarray(p['emb_phi'], np.float32)),
    }


# ----------------------------------------------------------------------------
# Jitted forward: cheap glue (flatten / embedding gather / slab build), then
# one pallas_call over the batch grid.
# ----------------------------------------------------------------------------
@functools.partial(jax.jit, static_argnames=("block_b", "num_classes"))
def convnet_forward(prep, energy, theta_input, phi_input, pt, *,
                    block_b=None, num_classes=3):
    B = energy.shape[0]
    cdt = prep['wconv'].dtype
    K1 = int(np.prod(energy.shape[1:]))
    KIN = prep['wconv'].shape[0]
    NCONV = prep['wconv'].shape[1]
    NF1 = prep['w1'].shape[1]
    NCLS = prep['w2'].shape[1]

    x_img = energy.reshape(B, K1).astype(jnp.float32)
    ones = jnp.ones((B, 1), jnp.float32)
    ptc = jnp.reshape(pt, (B, 1)).astype(jnp.float32)
    eth = jnp.take(prep['emb_theta'], theta_input, axis=0)
    eph = jnp.take(prep['emb_phi'], phi_input, axis=0)
    slab = jnp.concatenate([x_img, ones, ptc, eth, eph], axis=1)
    kused = slab.shape[1]

    if block_b is None:
        block_b = min(512, _round_up(B, 8))    # fill MXU M-dim; tiny B -> 1 step
    Bp = _round_up(B, block_b)
    slab = jnp.pad(slab, ((0, Bp - B), (0, KIN - kused))).astype(cdt)

    flops = 2 * Bp * (KIN * NCONV + NCONV * NF1 + NF1 * NCLS)
    bytes_acc = (Bp * KIN * slab.dtype.itemsize + Bp * NCLS * 4
                 + (KIN * NCONV + NCONV * NF1 + NF1 * NCLS) * cdt.itemsize)

    out = pl.pallas_call(
        convnet_kernel,
        out_shape=jax.ShapeDtypeStruct((Bp, NCLS), jnp.float32),
        grid=(Bp // block_b,),
        in_specs=[
            pl.BlockSpec((block_b, KIN), lambda b: (b, 0)),    # input slab
            pl.BlockSpec((KIN, NCONV), lambda b: (0, 0)),      # conv-as-matmul
            pl.BlockSpec((NCONV, NF1), lambda b: (0, 0)),      # fc1 (+ext,+biases)
            pl.BlockSpec((NF1, NCLS), lambda b: (0, 0)),       # fc2 (+bias)
        ],
        out_specs=pl.BlockSpec((block_b, NCLS), lambda b: (b, 0)),
        compiler_params=pltpu.CompilerParams(
            dimension_semantics=("parallel",)),
        cost_estimate=pl.CostEstimate(flops=flops, transcendentals=0,
                                      bytes_accessed=bytes_acc),
    )(slab, prep['wconv'], prep['w1'], prep['w2'])

    return out[:B, :num_classes]


# ----------------------------------------------------------------------------
# Pure NumPy reference (mirrors the PyTorch forward per event, eval mode)
# ----------------------------------------------------------------------------
def reference_forward(p, energy, theta_input, phi_input, pt):
    pn = {k: np.asarray(v, dtype=np.float32) for k, v in p.items()}
    e = np.asarray(energy, dtype=np.float32)
    B, C_in, H, W = e.shape
    F = pn['conv_w'].shape[0]
    ti = np.asarray(theta_input)
    pi = np.asarray(phi_input)
    ptn = np.asarray(pt, np.float32).reshape(B)
    outs = []
    for b in range(B):
        x_pad = np.pad(e[b], ((0, 0), (1, 1), (1, 1)))
        conv = np.zeros((F, H, W), np.float32)
        for f in range(F):
            for c in range(C_in):
                for di in range(3):
                    for dj in range(3):
                        conv[f] += pn['conv_w'][f, c, di, dj] * \
                            x_pad[c, di:di + H, dj:dj + W]
            conv[f] += pn['conv_b'][f]
        conv = np.maximum(conv, 0.0)
        x1 = conv.reshape(1, -1)
        feat = np.concatenate(
            [x1, ptn[b].reshape(1, 1),
             pn['emb_theta'][int(ti[b])][None, :],
             pn['emb_phi'][int(pi[b])][None, :]], axis=1)
        h = np.maximum(feat @ pn['fc1_w'].T + pn['fc1_b'], 0.0)
        outs.append(h @ pn['fc2_w'].T + pn['fc2_b'])
    return np.concatenate(outs, axis=0)


if __name__ == "__main__":
    # module hyper-parameters (consistent with the ECL CNN PID module)
    C_in, H_in, W_in = 1, 7, 7
    num_emb_theta, dim_emb_theta = 44, 4
    num_emb_phi, dim_emb_phi = 144, 4
    num_ext_input = 1
    init_f = 8
    num_fc1 = 32
    num_classes = 3
    B = 16                      # batched events (module semantics per row)

    num_flatten = H_in * W_in * init_f
    fc1_in = num_flatten + num_ext_input + dim_emb_theta + dim_emb_phi

    key = jax.random.PRNGKey(0)
    ks = jax.random.split(key, 12)
    params = {
        'emb_theta': 0.1 * jax.random.normal(ks[0], (num_emb_theta, dim_emb_theta), jnp.float32),
        'emb_phi':   0.1 * jax.random.normal(ks[1], (num_emb_phi, dim_emb_phi), jnp.float32),
        'conv_w':    0.1 * jax.random.normal(ks[2], (init_f, C_in, 3, 3), jnp.float32),
        'conv_b':    0.1 * jax.random.normal(ks[3], (init_f,), jnp.float32),
        'fc1_w':     0.1 * jax.random.normal(ks[4], (num_fc1, fc1_in), jnp.float32),
        'fc1_b':     0.1 * jax.random.normal(ks[5], (num_fc1,), jnp.float32),
        'fc2_w':     0.1 * jax.random.normal(ks[6], (num_classes, num_fc1), jnp.float32),
        'fc2_b':     0.1 * jax.random.normal(ks[7], (num_classes,), jnp.float32),
    }

    energy = jax.random.normal(ks[8], (B, C_in, H_in, W_in), jnp.float32)
    theta_input = jax.random.randint(ks[9], (B,), 0, num_emb_theta, dtype=jnp.int32)
    phi_input = jax.random.randint(ks[10], (B,), 0, num_emb_phi, dtype=jnp.int32)
    pt = jax.random.uniform(ks[11], (B,), jnp.float32)

    ref = reference_forward(params, energy, theta_input, phi_input, pt)

    # f32 path (strict tolerance)
    prep32 = prepare_params(params, (C_in, H_in, W_in), compute_dtype=jnp.float32)
    out32 = jax.block_until_ready(
        convnet_forward(prep32, energy, theta_input, phi_input, pt,
                        num_classes=num_classes))
    np.testing.assert_allclose(np.asarray(out32), ref, rtol=2e-3, atol=2e-3)

    # bf16 path (MXU-native on v6e/v7x; f32 accumulation) -- looser tolerance
    prep16 = prepare_params(params, (C_in, H_in, W_in), compute_dtype=jnp.bfloat16)
    out16 = jax.block_until_ready(
        convnet_forward(prep16, energy, theta_input, phi_input, pt,
                        num_classes=num_classes))
    np.testing.assert_allclose(np.asarray(out16), ref, rtol=3e-2, atol=3e-2)

    print("KERNEL_OK")
</pallas_src>

<mosaic_0001>
module attributes {stable_mosaic.version = 11 : i64} {
  func.func @convnet_kernel(%arg0: i32, %arg1: memref<16x128xf32, #tpu.memory_space<vmem>>, %arg2: memref<128x512xf32, #tpu.memory_space<vmem>>, %arg3: memref<512x128xf32, #tpu.memory_space<vmem>>, %arg4: memref<128x128xf32, #tpu.memory_space<vmem>>, %arg5: memref<16x128xf32, #tpu.memory_space<vmem>>) attributes {dimension_semantics = [#tpu.dimension_semantics<parallel>], iteration_bounds = array<i64: 1>, scalar_prefetch = 0 : i64, scratch_operands = 0 : i64, tpu.core_type = #tpu.core_type<tc>, window_params = [{transform_indices = @transform_0, window_bounds = array<i64: 16, 128>}, {pipeline_mode = #tpu.pipeline_mode<synchronous>, transform_indices = @transform_1, window_bounds = array<i64: 128, 512>}, {pipeline_mode = #tpu.pipeline_mode<synchronous>, transform_indices = @transform_2, window_bounds = array<i64: 512, 128>}, {pipeline_mode = #tpu.pipeline_mode<synchronous>, transform_indices = @transform_3, window_bounds = array<i64: 128, 128>}, {transform_indices = @transform_4, window_bounds = array<i64: 16, 128>}]} {
    %c0 = arith.constant 0 : index
    %c0_0 = arith.constant 0 : index
    %0 = vector.load %arg1[%c0, %c0_0] : memref<16x128xf32, #tpu.memory_space<vmem>>, vector<16x128xf32>
    %c0_1 = arith.constant 0 : index
    %c0_2 = arith.constant 0 : index
    %1 = vector.load %arg2[%c0_1, %c0_2] : memref<128x512xf32, #tpu.memory_space<vmem>>, vector<128x512xf32>
    %cst = arith.constant dense<0.000000e+00> : vector<16x512xf32>
    %2 = tpu.matmul %0, %1, %cst {dimension_numbers = #tpu.dot_dimension_numbers<[1], [0], [0], [1], [0, 0, 1, 1], [], []>} : vector<16x128xf32>, vector<128x512xf32>, vector<16x512xf32> -> vector<16x512xf32>
    %cst_3 = arith.constant 0.000000e+00 : f32
    %3 = vector.broadcast %cst_3 : f32 to vector<16x512xf32>
    %4 = arith.maximumf %2, %3 : vector<16x512xf32>
    %c0_4 = arith.constant 0 : index
    %c0_5 = arith.constant 0 : index
    %5 = vector.load %arg3[%c0_4, %c0_5] : memref<512x128xf32, #tpu.memory_space<vmem>>, vector<512x128xf32>
    %cst_6 = arith.constant dense<0.000000e+00> : vector<16x128xf32>
    %6 = tpu.matmul %4, %5, %cst_6 {dimension_numbers = #tpu.dot_dimension_numbers<[1], [0], [0], [1], [0, 0, 1, 1], [], []>} : vector<16x512xf32>, vector<512x128xf32>, vector<16x128xf32> -> vector<16x128xf32>
    %cst_7 = arith.constant 0.000000e+00 : f32
    %7 = vector.broadcast %cst_7 : f32 to vector<16x128xf32>
    %8 = arith.maximumf %6, %7 : vector<16x128xf32>
    %c0_8 = arith.constant 0 : index
    %c0_9 = arith.constant 0 : index
    %9 = vector.load %arg4[%c0_8, %c0_9] : memref<128x128xf32, #tpu.memory_space<vmem>>, vector<128x128xf32>
    %cst_10 = arith.constant dense<0.000000e+00> : vector<16x128xf32>
    %10 = tpu.matmul %8, %9, %cst_10 {dimension_numbers = #tpu.dot_dimension_numbers<[1], [0], [0], [1], [0, 0, 1, 1], [], []>} : vector<16x128xf32>, vector<128x128xf32>, vector<16x128xf32> -> vector<16x128xf32>
    %c0_11 = arith.constant 0 : index
    %c0_12 = arith.constant 0 : index
    %11 = vector.load %arg5[%c0_11, %c0_12] : memref<16x128xf32, #tpu.memory_space<vmem>>, vector<16x128xf32>
    tpu.vector_store %arg5[%c0_11, %c0_12], %10 {strides = array<i32>} : memref<16x128xf32, #tpu.memory_space<vmem>>, vector<16x128xf32>,
    return
  }
  func.func @transform_0(%arg0: i32) -> (i32, i32) {
    %c0_i32 = arith.constant 0 : i32
    %c0_i32_0 = arith.constant 0 : i32
    return %arg0, %c0_i32 : i32, i32
  }
  func.func @transform_1(%arg0: i32) -> (i32, i32) {
    %c0_i32 = arith.constant 0 : i32
    %c0_i32_0 = arith.constant 0 : i32
    %c0_i32_1 = arith.constant 0 : i32
    return %c0_i32, %c0_i32_0 : i32, i32
  }
  func.func @transform_2(%arg0: i32) -> (i32, i32) {
    %c0_i32 = arith.constant 0 : i32
    %c0_i32_0 = arith.constant 0 : i32
    %c0_i32_1 = arith.constant 0 : i32
    return %c0_i32, %c0_i32_0 : i32, i32
  }
  func.func @transform_3(%arg0: i32) -> (i32, i32) {
    %c0_i32 = arith.constant 0 : i32
    %c0_i32_0 = arith.constant 0 : i32
    %c0_i32_1 = arith.constant 0 : i32
    return %c0_i32, %c0_i32_0 : i32, i32
  }
  func.func @transform_4(%arg0: i32) -> (i32, i32) {
    %c0_i32 = arith.constant 0 : i32
    %c0_i32_0 = arith.constant 0 : i32
    return %arg0, %c0_i32 : i32, i32
  }
}

</mosaic_0001>

<llo_original>
// kernel: convnet_forward.1
$region0: #{convnet_forward.1}
  #allocation0 [shape = 'u32[]', space=smem, size = 0x4, offset = 0x4, fixed_abs, tag = 'smem constant byte address 0x4 - core index']
  #allocation1 [shape = 'u32[144,128]{1,0:T(1,128)}', space=vmem, size = 0x12000, scoped, tag = 'internal scratch']
  %s0 = inlined_call_operand.vmem [shape: f32[16,128], index: 0, kind: input, shape index: {}]
  %s1 = inlined_call_operand.vmem [shape: f32[128,512], index: 1, kind: input, shape index: {}]
  %s2 = inlined_call_operand.vmem [shape: f32[512,128], index: 2, kind: input, shape index: {}]
  %s3 = inlined_call_operand.hbm [shape: f32[128,128], index: 3, kind: input, shape index: {}]
  %s4 = inlined_call_operand.vmem [shape: f32[16,128], index: 4, kind: output, shape index: {}]
  %s5 = sld [smem:[#allocation0]]
  $region30: #{convnet_forward.1} parent=0
    _
  %s7 = ssub.s32 1, %s5
  %s8 = scalar_select 0, %s7, %s5
  $region1: #{convnet_forward.1} parent=0
    #allocation2 [shape = 'u8[65536]{0}', space=vmem, size = 0x10000, scoped, tag = 'input window, operand 3, single buffered']
    #allocation3 [shape = 's32[1]{0}', space=sflag, size = 0x4, scoped, tag = 'scoped memory for convnet_forward.1']
    %9 = vsyncpa [#allocation3], 0
    // Predicated region
    $region2: #{convnet_forward.1} parent=1 // pred_check
      _
    $region3: #{convnet_forward.1} parent=1 // pred_check_branch
      %11 = sbr.rel (0) target = $region5
    $region4: #{convnet_forward.1} parent=1 // pred_region
      _
    $region5: #{convnet_forward.1} parent=1 // pred_fallthru
      _
    // Predicated region
    $region6: #{convnet_forward.1} parent=1 // pred_check
      _
    $region7: #{convnet_forward.1} parent=1 // pred_check_branch
      %13 = sbr.rel (0) target = $region9
    $region8: #{convnet_forward.1} parent=1 // pred_region
      _
    $region9: #{convnet_forward.1} parent=1 // pred_fallthru
      _
    // Predicated region
    $region10: #{convnet_forward.1} parent=1 // pred_check
      _
    $region11: #{convnet_forward.1} parent=1 // pred_check_branch
      %15 = sbr.rel (0) target = $region13
    $region12: #{convnet_forward.1} parent=1 // pred_region
      _
    $region13: #{convnet_forward.1} parent=1 // pred_fallthru
      _
    // Predicated region
    $region14: #{convnet_forward.1} parent=1 // pred_check
      _
    $region15: #{convnet_forward.1} parent=1 // pred_check_branch
      %17 = sbr.rel (0) target = $region17
    $region16: #{convnet_forward.1} parent=1 // pred_region
      %s19 = ssub.s32 2048, 2048
      %20 = vsyncadd [#allocation3], %s19
      %s21 = sshll.u32 [#allocation2], 4
      %s22 = int_to_ptr.vmem [resolvable:$true] %s21
      %27 = dma.hbm_to_vmem [thread:$0]  %s3, 2048, %s22, [#allocation3], 128, 128, 8
    $region17: #{convnet_forward.1} parent=1 // pred_fallthru
      _
    // Predicated region
    $region18: #{convnet_forward.1} parent=1 // pred_check
      _
    $region19: #{convnet_forward.1} parent=1 // pred_check_branch
      %29 = sbr.rel (0) target = $region21
    $region20: #{convnet_forward.1} parent=1 // pred_region
      %30 = dma.done [#allocation3], 2048
    $region21: #{convnet_forward.1} parent=1 // pred_fallthru
      _
    %v31 = vld [vmem:[%s0] sm:$0xff]
    %v32 = vld [vmem:[%s0 + $0x8] sm:$0xff]
    %v33 = vld [vmem:[%s1] sm:$0xff]
    %v34 = vld [vmem:[%s1 + $0x8] sm:$0xff]
    %v35 = vld [vmem:[%s1 + $0x10] sm:$0xff]
    %v36 = vld [vmem:[%s1 + $0x18] sm:$0xff]
    %v37 = vld [vmem:[%s1 + $0x20] sm:$0xff]
    %v38 = vld [vmem:[%s1 + $0x28] sm:$0xff]
    %v39 = vld [vmem:[%s1 + $0x30] sm:$0xff]
    %v40 = vld [vmem:[%s1 + $0x38] sm:$0xff]
    %v41 = vld [vmem:[%s1 + $0x40] sm:$0xff]
    %v42 = vld [vmem:[%s1 + $0x48] sm:$0xff]
    %v43 = vld [vmem:[%s1 + $0x50] sm:$0xff]
    %v44 = vld [vmem:[%s1 + $0x58] sm:$0xff]
    %v45 = vld [vmem:[%s1 + $0x60] sm:$0xff]
    %v46 = vld [vmem:[%s1 + $0x68] sm:$0xff]
    %v47 = vld [vmem:[%s1 + $0x70] sm:$0xff]
    %v48 = vld [vmem:[%s1 + $0x78] sm:$0xff]
    %v49 = vld [vmem:[%s1 + $0x80] sm:$0xff]
    %v50 = vld [vmem:[%s1 + $0x88] sm:$0xff]
    %v51 = vld [vmem:[%s1 + $0x90] sm:$0xff]
    %v52 = vld [vmem:[%s1 + $0x98] sm:$0xff]
    %v53 = vld [vmem:[%s1 + $0xa0] sm:$0xff]
    %v54 = vld [vmem:[%s1 + $0xa8] sm:$0xff]
    %v55 = vld [vmem:[%s1 + $0xb0] sm:$0xff]
    %v56 = vld [vmem:[%s1 + $0xb8] sm:$0xff]
    %v57 = vld [vmem:[%s1 + $0xc0] sm:$0xff]
    %v58 = vld [vmem:[%s1 + $0xc8] sm:$0xff]
    %v59 = vld [vmem:[%s1 + $0xd0] sm:$0xff]
    %v60 = vld [vmem:[%s1 + $0xd8] sm:$0xff]
    %v61 = vld [vmem:[%s1 + $0xe0] sm:$0xff]
    %v62 = vld [vmem:[%s1 + $0xe8] sm:$0xff]
    %v63 = vld [vmem:[%s1 + $0xf0] sm:$0xff]
    %v64 = vld [vmem:[%s1 + $0xf8] sm:$0xff]
    %v65 = vld [vmem:[%s1 + $0x100] sm:$0xff]
    %v66 = vld [vmem:[%s1 + $0x108] sm:$0xff]
    %v67 = vld [vmem:[%s1 + $0x110] sm:$0xff]
    %v68 = vld [vmem:[%s1 + $0x118] sm:$0xff]
    %v69 = vld [vmem:[%s1 + $0x120] sm:$0xff]
    %v70 = vld [vmem:[%s1 + $0x128] sm:$0xff]
    %v71 = vld [vmem:[%s1 + $0x130] sm:$0xff]
    %v72 = vld [vmem:[%s1 + $0x138] sm:$0xff]
    %v73 = vld [vmem:[%s1 + $0x140] sm:$0xff]
    %v74 = vld [vmem:[%s1 + $0x148] sm:$0xff]
    %v75 = vld [vmem:[%s1 + $0x150] sm:$0xff]
    %v76 = vld [vmem:[%s1 + $0x158] sm:$0xff]
    %v77 = vld [vmem:[%s1 + $0x160] sm:$0xff]
    %v78 = vld [vmem:[%s1 + $0x168] sm:$0xff]
    %v79 = vld [vmem:[%s1 + $0x170] sm:$0xff]
    %v80 = vld [vmem:[%s1 + $0x178] sm:$0xff]
    %v81 = vld [vmem:[%s1 + $0x180] sm:$0xff]
    %v82 = vld [vmem:[%s1 + $0x188] sm:$0xff]
    %v83 = vld [vmem:[%s1 + $0x190] sm:$0xff]
    %v84 = vld [vmem:[%s1 + $0x198] sm:$0xff]
    %v85 = vld [vmem:[%s1 + $0x1a0] sm:$0xff]
    %v86 = vld [vmem:[%s1 + $0x1a8] sm:$0xff]
    %v87 = vld [vmem:[%s1 + $0x1b0] sm:$0xff]
    %v88 = vld [vmem:[%s1 + $0x1b8] sm:$0xff]
    %v89 = vld [vmem:[%s1 + $0x1c0] sm:$0xff]
    %v90 = vld [vmem:[%s1 + $0x1c8] sm:$0xff]
    %v91 = vld [vmem:[%s1 + $0x1d0] sm:$0xff]
    %v92 = vld [vmem:[%s1 + $0x1d8] sm:$0xff]
    %v93 = vld [vmem:[%s1 + $0x1e0] sm:$0xff]
    %v94 = vld [vmem:[%s1 + $0x1e8] sm:$0xff]
    %v95 = vld [vmem:[%s1 + $0x1f0] sm:$0xff]
    %v96 = vld [vmem:[%s1 + $0x1f8] sm:$0xff]
    %97 = vmatprep.subr.mxu0 %v34
    %98 = vmatpush1.msra.mxu0 %v33
    %99 = vmatprep.subr.mxu0 %v38
    %100 = vmatpush1.msra.mxu0 %v37
    %101 = vmatprep.subr.mxu0 %v42
    %102 = vmatpush1.msra.mxu0 %v41
    %103 = vmatprep.subr.mxu0 %v46
    %104 = vmatpush1.msra.mxu0 %v45
    %105 = vmatprep.subr.mxu0 %v50
    %106 = vmatpush1.msra.mxu0 %v49
    %107 = vmatprep.subr.mxu0 %v54
    %108 = vmatpush1.msra.mxu0 %v53
    %109 = vmatprep.subr.mxu0 %v58
    %110 = vmatpush1.msra.mxu0 %v57
    %111 = vmatprep.subr.mxu0 %v62
    %112 = vmatpush1.msra.mxu0 %v61
    %113 = vmatprep.subr.mxu0 %v66
    %114 = vmatpush1.msra.mxu0 %v65
    %115 = vmatprep.subr.mxu0 %v70
    %116 = vmatpush1.msra.mxu0 %v69
    %117 = vmatprep.subr.mxu0 %v74
    %118 = vmatpush1.msra.mxu0 %v73
    %119 = vmatprep.subr.mxu0 %v78
    %120 = vmatpush1.msra.mxu0 %v77
    %121 = vmatprep.subr.mxu0 %v82
    %122 = vmatpush1.msra.mxu0 %v81
    %123 = vmatprep.subr.mxu0 %v86
    %124 = vmatpush1.msra.mxu0 %v85
    %125 = vmatprep.subr.mxu0 %v90
    %126 = vmatpush1.msra.mxu0 %v89
    %127 = vmatprep.subr.mxu0 %v94
    %128 = vmatpush1.msra.mxu0 %v93
    %129 = vmatprep.subr.mxu0 0.0
    %130 = vmatpush1.msra.mxu0 0.0
    %131 = vmatprep.subr.mxu0 0.0
    %132 = vmatpush1.msra.mxu0 0.0
    %133 = vmatprep.subr.mxu0 0.0
    %134 = vmatpush1.msra.mxu0 0.0
    %135 = vmatprep.subr.mxu0 0.0
    %136 = vmatpush1.msra.mxu0 0.0
    %137 = vmatprep.subr.mxu0 0.0
    %138 = vmatpush1.msra.mxu0 0.0
    %139 = vmatprep.subr.mxu0 0.0
    %140 = vmatpush1.msra.mxu0 0.0
    %141 = vmatprep.subr.mxu0 0.0
    %142 = vmatpush1.msra.mxu0 0.0
    %143 = vmatprep.subr.mxu0 0.0
    %144 = vmatpush1.msra.mxu0 0.0
    %145 = vmatprep.subr.mxu0 0.0
    %146 = vmatpush1.msra.mxu0 0.0
    %147 = vmatprep.subr.mxu0 0.0
    %148 = vmatpush1.msra.mxu0 0.0
    %149 = vmatprep.subr.mxu0 0.0
    %150 = vmatpush1.msra.mxu0 0.0
    %151 = vmatprep.subr.mxu0 0.0
    %152 = vmatpush1.msra.mxu0 0.0
    %153 = vmatprep.subr.mxu0 0.0
    %154 = vmatpush1.msra.mxu0 0.0
    %155 = vmatprep.subr.mxu0 0.0
    %156 = vmatpush1.msra.mxu0 0.0
    %157 = vmatprep.subr.mxu0 0.0
    %158 = vmatpush1.msra.mxu0 0.0
    %159 = vmatprep.subr.mxu0 0.0
    %160 = vmatpush1.msra.mxu0 0.0
    %161 = vmatprep.mubr.f32.mxu0 0.0
    %162 = vmatmul.mubr.f32.gmra.mrb[0].mxu0 %v31
    %v163 = vpop.f32.mrb[0].mxu0
    %v164 = vadd.f32 0.0, %v163
    %v165 = vpop.f32.mrb[0].mxu0
    %v166 = vadd.f32 0.0, %v165
    %167 = vmatprep.mubr.f32.mxu0 0.0
    %168 = vmatmul.mubr.f32.gmra.mrb[0].mxu0 %v32
    %v169 = vpop.f32.mrb[0].mxu0
    %v170 = vadd.f32 0.0, %v169
    %v171 = vpop.f32.mrb[0].mxu0
    %v172 = vadd.f32 0.0, %v171
    %173 = vdwg.mxu0
    %174 = vmatprep.subr.mxu0 %v36
    %175 = vmatpush1.msra.mxu0 %v35
    %176 = vmatprep.subr.mxu0 %v40
    %177 = vmatpush1.msra.mxu0 %v39
    %178 = vmatprep.subr.mxu0 %v44
    %179 = vmatpush1.msra.mxu0 %v43
    %180 = vmatprep.subr.mxu0 %v48
    %181 = vmatpush1.msra.mxu0 %v47
    %182 = vmatprep.subr.mxu0 %v52
    %183 = vmatpush1.msra.mxu0 %v51
    %184 = vmatprep.subr.mxu0 %v56
    %185 = vmatpush1.msra.mxu0 %v55
    %186 = vmatprep.subr.mxu0 %v60
    %187 = vmatpush1.msra.mxu0 %v59
    %188 = vmatprep.subr.mxu0 %v64
    %189 = vmatpush1.msra.mxu0 %v63
    %190 = vmatprep.subr.mxu0 %v68
    %191 = vmatpush1.msra.mxu0 %v67
    %192 = vmatprep.subr.mxu0 %v72
    %193 = vmatpush1.msra.mxu0 %v71
    %194 = vmatprep.subr.mxu0 %v76
    %195 = vmatpush1.msra.mxu0 %v75
    %196 = vmatprep.subr.mxu0 %v80
    %197 = vmatpush1.msra.mxu0 %v79
    %198 = vmatprep.subr.mxu0 %v84
    %199 = vmatpush1.msra.mxu0 %v83
    %200 = vmatprep.subr.mxu0 %v88
    %201 = vmatpush1.msra.mxu0 %v87
    %202 = vmatprep.subr.mxu0 %v92
    %203 = vmatpush1.msra.mxu0 %v91
    %204 = vmatprep.subr.mxu0 %v96
    %205 = vmatpush1.msra.mxu0 %v95
    %206 = vmatprep.subr.mxu0 0.0
    %207 = vmatpush1.msra.mxu0 0.0
    %208 = vmatprep.subr.mxu0 0.0
    %209 = vmatpush1.msra.mxu0 0.0
    %210 = vmatprep.subr.mxu0 0.0
    %211 = vmatpush1.msra.mxu0 0.0
    %212 = vmatprep.subr.mxu0 0.0
    %213 = vmatpush1.msra.mxu0 0.0
    %214 = vmatprep.subr.mxu0 0.0
    %215 = vmatpush1.msra.mxu0 0.0
    %216 = vmatprep.subr.mxu0 0.0
    %217 = vmatpush1.msra.mxu0 0.0
    %218 = vmatprep.subr.mxu0 0.0
    %219 = vmatpush1.msra.mxu0 0.0
    %220 = vmatprep.subr.mxu0 0.0
    %221 = vmatpush1.msra.mxu0 0.0
    %222 = vmatprep.subr.mxu0 0.0
    %223 = vmatpush1.msra.mxu0 0.0
    %224 = vmatprep.subr.mxu0 0.0
    %225 = vmatpush1.msra.mxu0 0.0
    %226 = vmatprep.subr.mxu0 0.0
    %227 = vmatpush1.msra.mxu0 0.0
    %228 = vmatprep.subr.mxu0 0.0
    %229 = vmatpush1.msra.mxu0 0.0
    %230 = vmatprep.subr.mxu0 0.0
    %231 = vmatpush1.msra.mxu0 0.0
    %232 = vmatprep.subr.mxu0 0.0
    %233 = vmatpush1.msra.mxu0 0.0
    %234 = vmatprep.subr.mxu0 0.0
    %235 = vmatpush1.msra.mxu0 0.0
    %236 = vmatprep.subr.mxu0 0.0
    %237 = vmatpush1.msra.mxu0 0.0
    %238 = vmatprep.mubr.f32.mxu0 0.0
    %239 = vmatmul.mubr.f32.gmra.mrb[0].mxu0 %v31
    %v240 = vpop.f32.mrb[0].mxu0
    %v241 = vadd.f32 0.0, %v240
    %v242 = vpop.f32.mrb[0].mxu0
    %v243 = vadd.f32 0.0, %v242
    %244 = vmatprep.mubr.f32.mxu0 0.0
    %245 = vmatmul.mubr.f32.gmra.mrb[0].mxu0 %v32
    %v246 = vpop.f32.mrb[0].mxu0
    %v247 = vadd.f32 0.0, %v246
    %v248 = vpop.f32.mrb[0].mxu0
    %v249 = vadd.f32 0.0, %v248
    %250 = vdwg.mxu0
    %v251 = vmax.f32 %v164, 0.0
    %v252 = vmax.f32 %v166, 0.0
    %v253 = vmax.f32 %v241, 0.0
    %v254 = vmax.f32 %v243, 0.0
    %v255 = vmax.f32 %v170, 0.0
    %v256 = vmax.f32 %v172, 0.0
    %v257 = vmax.f32 %v247, 0.0
    %v258 = vmax.f32 %v249, 0.0
    %v259 = vld [vmem:[%s2] sm:$0xff]
    %v260 = vld [vmem:[%s2 + $0x8] sm:$0xff]
    %v261 = vld [vmem:[%s2 + $0x10] sm:$0xff]
    %v262 = vld [vmem:[%s2 + $0x18] sm:$0xff]
    %v263 = vld [vmem:[%s2 + $0x20] sm:$0xff]
    %v264 = vld [vmem:[%s2 + $0x28] sm:$0xff]
    %v265 = vld [vmem:[%s2 + $0x30] sm:$0xff]
    %v266 = vld [vmem:[%s2 + $0x38] sm:$0xff]
    %v267 = vld [vmem:[%s2 + $0x40] sm:$0xff]
    %v268 = vld [vmem:[%s2 + $0x48] sm:$0xff]
    %v269 = vld [vmem:[%s2 + $0x50] sm:$0xff]
    %v270 = vld [vmem:[%s2 + $0x58] sm:$0xff]
    %v271 = vld [vmem:[%s2 + $0x60] sm:$0xff]
    %v272 = vld [vmem:[%s2 + $0x68] sm:$0xff]
    %v273 = vld [vmem:[%s2 + $0x70] sm:$0xff]
    %v274 = vld [vmem:[%s2 + $0x78] sm:$0xff]
    %v275 = vld [vmem:[%s2 + $0x80] sm:$0xff]
    %v276 = vld [vmem:[%s2 + $0x88] sm:$0xff]
    %v277 = vld [vmem:[%s2 + $0x90] sm:$0xff]
    %v278 = vld [vmem:[%s2 + $0x98] sm:$0xff]
    %v279 = vld [vmem:[%s2 + $0xa0] sm:$0xff]
    %v280 = vld [vmem:[%s2 + $0xa8] sm:$0xff]
    %v281 = vld [vmem:[%s2 + $0xb0] sm:$0xff]
    %v282 = vld [vmem:[%s2 + $0xb8] sm:$0xff]
    %v283 = vld [vmem:[%s2 + $0xc0] sm:$0xff]
    %v284 = vld [vmem:[%s2 + $0xc8] sm:$0xff]
    %v285 = vld [vmem:[%s2 + $0xd0] sm:$0xff]
    %v286 = vld [vmem:[%s2 + $0xd8] sm:$0xff]
    %v287 = vld [vmem:[%s2 + $0xe0] sm:$0xff]
    %v288 = vld [vmem:[%s2 + $0xe8] sm:$0xff]
    %v289 = vld [vmem:[%s2 + $0xf0] sm:$0xff]
    %v290 = vld [vmem:[%s2 + $0xf8] sm:$0xff]
    %v291 = vld [vmem:[%s2 + $0x100] sm:$0xff]
    %v292 = vld [vmem:[%s2 + $0x108] sm:$0xff]
    %v293 = vld [vmem:[%s2 + $0x110] sm:$0xff]
    %v294 = vld [vmem:[%s2 + $0x118] sm:$0xff]
    %v295 = vld [vmem:[%s2 + $0x120] sm:$0xff]
    %v296 = vld [vmem:[%s2 + $0x128] sm:$0xff]
    %v297 = vld [vmem:[%s2 + $0x130] sm:$0xff]
    %v298 = vld [vmem:[%s2 + $0x138] sm:$0xff]
    %v299 = vld [vmem:[%s2 + $0x140] sm:$0xff]
    %v300 = vld [vmem:[%s2 + $0x148] sm:$0xff]
    %v301 = vld [vmem:[%s2 + $0x150] sm:$0xff]
    %v302 = vld [vmem:[%s2 + $0x158] sm:$0xff]
    %v303 = vld [vmem:[%s2 + $0x160] sm:$0xff]
    %v304 = vld [vmem:[%s2 + $0x168] sm:$0xff]
    %v305 = vld [vmem:[%s2 + $0x170] sm:$0xff]
    %v306 = vld [vmem:[%s2 + $0x178] sm:$0xff]
    %v307 = vld [vmem:[%s2 + $0x180] sm:$0xff]
    %v308 = vld [vmem:[%s2 + $0x188] sm:$0xff]
    %v309 = vld [vmem:[%s2 + $0x190] sm:$0xff]
    %v310 = vld [vmem:[%s2 + $0x198] sm:$0xff]
    %v311 = vld [vmem:[%s2 + $0x1a0] sm:$0xff]
    %v312 = vld [vmem:[%s2 + $0x1a8] sm:$0xff]
    %v313 = vld [vmem:[%s2 + $0x1b0] sm:$0xff]
    %v314 = vld [vmem:[%s2 + $0x1b8] sm:$0xff]
    %v315 = vld [vmem:[%s2 + $0x1c0] sm:$0xff]
    %v316 = vld [vmem:[%s2 + $0x1c8] sm:$0xff]
    %v317 = vld [vmem:[%s2 + $0x1d0] sm:$0xff]
    %v318 = vld [vmem:[%s2 + $0x1d8] sm:$0xff]
    %v319 = vld [vmem:[%s2 + $0x1e0] sm:$0xff]
    %v320 = vld [vmem:[%s2 + $0x1e8] sm:$0xff]
    %v321 = vld [vmem:[%s2 + $0x1f0] sm:$0xff]
    %v322 = vld [vmem:[%s2 + $0x1f8] sm:$0xff]
    %323 = vmatprep.subr.mxu0 0.0
    %324 = vmatpush1.msra.mxu0 %v259
    %325 = vmatprep.subr.mxu0 0.0
    %326 = vmatpush1.msra.mxu0 %v260
    %327 = vmatprep.subr.mxu0 0.0
    %328 = vmatpush1.msra.mxu0 %v261
    %329 = vmatprep.subr.mxu0 0.0
    %330 = vmatpush1.msra.mxu0 %v262
    %331 = vmatprep.subr.mxu0 0.0
    %332 = vmatpush1.msra.mxu0 %v263
    %333 = vmatprep.subr.mxu0 0.0
    %334 = vmatpush1.msra.mxu0 %v264
    %335 = vmatprep.subr.mxu0 0.0
    %336 = vmatpush1.msra.mxu0 %v265
    %337 = vmatprep.subr.mxu0 0.0
    %338 = vmatpush1.msra.mxu0 %v266
    %339 = vmatprep.subr.mxu0 0.0
    %340 = vmatpush1.msra.mxu0 %v267
    %341 = vmatprep.subr.mxu0 0.0
    %342 = vmatpush1.msra.mxu0 %v268
    %343 = vmatprep.subr.mxu0 0.0
    %344 = vmatpush1.msra.mxu0 %v269
    %345 = vmatprep.subr.mxu0 0.0
    %346 = vmatpush1.msra.mxu0 %v270
    %347 = vmatprep.subr.mxu0 0.0
    %348 = vmatpush1.msra.mxu0 %v271
    %349 = vmatprep.subr.mxu0 0.0
    %350 = vmatpush1.msra.mxu0 %v272
    %351 = vmatprep.subr.mxu0 0.0
    %352 = vmatpush1.msra.mxu0 %v273
    %353 = vmatprep.subr.mxu0 0.0
    %354 = vmatpush1.msra.mxu0 %v274
    %355 = vmatprep.subr.mxu0 0.0
    %356 = vmatpush1.msra.mxu0 %v275
    %357 = vmatprep.subr.mxu0 0.0
    %358 = vmatpush1.msra.mxu0 %v276
    %359 = vmatprep.subr.mxu0 0.0
    %360 = vmatpush1.msra.mxu0 %v277
    %361 = vmatprep.subr.mxu0 0.0
    %362 = vmatpush1.msra.mxu0 %v278
    %363 = vmatprep.subr.mxu0 0.0
    %364 = vmatpush1.msra.mxu0 %v279
    %365 = vmatprep.subr.mxu0 0.0
    %366 = vmatpush1.msra.mxu0 %v280
    %367 = vmatprep.subr.mxu0 0.0
    %368 = vmatpush1.msra.mxu0 %v281
    %369 = vmatprep.subr.mxu0 0.0
    %370 = vmatpush1.msra.mxu0 %v282
    %371 = vmatprep.subr.mxu0 0.0
    %372 = vmatpush1.msra.mxu0 %v283
    %373 = vmatprep.subr.mxu0 0.0
    %374 = vmatpush1.msra.mxu0 %v284
    %375 = vmatprep.subr.mxu0 0.0
    %376 = vmatpush1.msra.mxu0 %v285
    %377 = vmatprep.subr.mxu0 0.0
    %378 = vmatpush1.msra.mxu0 %v286
    %379 = vmatprep.subr.mxu0 0.0
    %380 = vmatpush1.msra.mxu0 %v287
    %381 = vmatprep.subr.mxu0 0.0
    %382 = vmatpush1.msra.mxu0 %v288
    %383 = vmatprep.subr.mxu0 0.0
    %384 = vmatpush1.msra.mxu0 %v289
    %385 = vmatprep.subr.mxu0 0.0
    %386 = vmatpush1.msra.mxu0 %v290
    %387 = vmatprep.mubr.f32.mxu0 %v252
    %388 = vmatmul.mubr.f32.gmra.mrb[0].mxu0 %v251
    %v389 = vpop.f32.mrb[0].mxu0
    %v390 = vadd.f32 0.0, %v389
    %v391 = vpop.f32.mrb[0].mxu0
    %392 = vmatprep.mubr.f32.mxu0 %v256
    %393 = vmatmul.mubr.f32.gmra.mrb[0].mxu0 %v255
    %v394 = vpop.f32.mrb[0].mxu0
    %v395 = vadd.f32 0.0, %v394
    %v396 = vpop.f32.mrb[0].mxu0
    %397 = vdwg.mxu0
    %398 = vmatprep.subr.mxu0 0.0
    %399 = vmatpush1.msra.mxu0 %v291
    %400 = vmatprep.subr.mxu0 0.0
    %401 = vmatpush1.msra.mxu0 %v292
    %402 = vmatprep.subr.mxu0 0.0
    %403 = vmatpush1.msra.mxu0 %v293
    %404 = vmatprep.subr.mxu0 0.0
    %405 = vmatpush1.msra.mxu0 %v294
    %406 = vmatprep.subr.mxu0 0.0
    %407 = vmatpush1.msra.mxu0 %v295
    %408 = vmatprep.subr.mxu0 0.0
    %409 = vmatpush1.msra.mxu0 %v296
    %410 = vmatprep.subr.mxu0 0.0
    %411 = vmatpush1.msra.mxu0 %v297
    %412 = vmatprep.subr.mxu0 0.0
    %413 = vmatpush1.msra.mxu0 %v298
    %414 = vmatprep.subr.mxu0 0.0
    %415 = vmatpush1.msra.mxu0 %v299
    %416 = vmatprep.subr.mxu0 0.0
    %417 = vmatpush1.msra.mxu0 %v300
    %418 = vmatprep.subr.mxu0 0.0
    %419 = vmatpush1.msra.mxu0 %v301
    %420 = vmatprep.subr.mxu0 0.0
    %421 = vmatpush1.msra.mxu0 %v302
    %422 = vmatprep.subr.mxu0 0.0
    %423 = vmatpush1.msra.mxu0 %v303
    %424 = vmatprep.subr.mxu0 0.0
    %425 = vmatpush1.msra.mxu0 %v304
    %426 = vmatprep.subr.mxu0 0.0
    %427 = vmatpush1.msra.mxu0 %v305
    %428 = vmatprep.subr.mxu0 0.0
    %429 = vmatpush1.msra.mxu0 %v306
    %430 = vmatprep.subr.mxu0 0.0
    %431 = vmatpush1.msra.mxu0 %v307
    %432 = vmatprep.subr.mxu0 0.0
    %433 = vmatpush1.msra.mxu0 %v308
    %434 = vmatprep.subr.mxu0 0.0
    %435 = vmatpush1.msra.mxu0 %v309
    %436 = vmatprep.subr.mxu0 0.0
    %437 = vmatpush1.msra.mxu0 %v310
    %438 = vmatprep.subr.mxu0 0.0
    %439 = vmatpush1.msra.mxu0 %v311
    %440 = vmatprep.subr.mxu0 0.0
    %441 = vmatpush1.msra.mxu0 %v312
    %442 = vmatprep.subr.mxu0 0.0
    %443 = vmatpush1.msra.mxu0 %v313
    %444 = vmatprep.subr.mxu0 0.0
    %445 = vmatpush1.msra.mxu0 %v314
    %446 = vmatprep.subr.mxu0 0.0
    %447 = vmatpush1.msra.mxu0 %v315
    %448 = vmatprep.subr.mxu0 0.0
    %449 = vmatpush1.msra.mxu0 %v316
    %450 = vmatprep.subr.mxu0 0.0
    %451 = vmatpush1.msra.mxu0 %v317
    %452 = vmatprep.subr.mxu0 0.0
    %453 = vmatpush1.msra.mxu0 %v318
    %454 = vmatprep.subr.mxu0 0.0
    %455 = vmatpush1.msra.mxu0 %v319
    %456 = vmatprep.subr.mxu0 0.0
    %457 = vmatpush1.msra.mxu0 %v320
    %458 = vmatprep.subr.mxu0 0.0
    %459 = vmatpush1.msra.mxu0 %v321
    %460 = vmatprep.subr.mxu0 0.0
    %461 = vmatpush1.msra.mxu0 %v322
    %462 = vmatprep.mubr.f32.mxu0 %v254
    %463 = vmatmul.mubr.f32.gmra.mrb[0].mxu0 %v253
    %v464 = vpop.f32.mrb[0].mxu0
    %v465 = vadd.f32 %v390, %v464
    %v466 = vpop.f32.mrb[0].mxu0
    %467 = vmatprep.mubr.f32.mxu0 %v258
    %468 = vmatmul.mubr.f32.gmra.mrb[0].mxu0 %v257
    %v469 = vpop.f32.mrb[0].mxu0
    %v470 = vadd.f32 %v395, %v469
    %v471 = vpop.f32.mrb[0].mxu0
    %472 = vdwg.mxu0
    %v473 = vmax.f32 %v465, 0.0
    %v474 = vmax.f32 %v470, 0.0
    %v475 = vld [vmem:[#allocation2] sm:$0xff]
    %v476 = vld [vmem:[#allocation2 + $0x8] sm:$0xff]
    %v477 = vld [vmem:[#allocation2 + $0x10] sm:$0xff]
    %v478 = vld [vmem:[#allocation2 + $0x18] sm:$0xff]
    %v479 = vld [vmem:[#allocation2 + $0x20] sm:$0xff]
    %v480 = vld [vmem:[#allocation2 + $0x28] sm:$0xff]
    %v481 = vld [vmem:[#allocation2 + $0x30] sm:$0xff]
    %v482 = vld [vmem:[#allocation2 + $0x38] sm:$0xff]
    %v483 = vld [vmem:[#allocation2 + $0x40] sm:$0xff]
    %v484 = vld [vmem:[#allocation2 + $0x48] sm:$0xff]
    %v485 = vld [vmem:[#allocation2 + $0x50] sm:$0xff]
    %v486 = vld [vmem:[#allocation2 + $0x58] sm:$0xff]
    %v487 = vld [vmem:[#allocation2 + $0x60] sm:$0xff]
    %v488 = vld [vmem:[#allocation2 + $0x68] sm:$0xff]
    %v489 = vld [vmem:[#allocation2 + $0x70] sm:$0xff]
    %v490 = vld [vmem:[#allocation2 + $0x78] sm:$0xff]
    %491 = vmatprep.subr.mxu0 0.0
    %492 = vmatpush1.msra.mxu0 %v475
    %493 = vmatprep.subr.mxu0 0.0
    %494 = vmatpush1.msra.mxu0 %v476
    %495 = vmatprep.subr.mxu0 0.0
    %496 = vmatpush1.msra.mxu0 %v477
    %497 = vmatprep.subr.mxu0 0.0
    %498 = vmatpush1.msra.mxu0 %v478
    %499 = vmatprep.subr.mxu0 0.0
    %500 = vmatpush1.msra.mxu0 %v479
    %501 = vmatprep.subr.mxu0 0.0
    %502 = vmatpush1.msra.mxu0 %v480
    %503 = vmatprep.subr.mxu0 0.0
    %504 = vmatpush1.msra.mxu0 %v481
    %505 = vmatprep.subr.mxu0 0.0
    %506 = vmatpush1.msra.mxu0 %v482
    %507 = vmatprep.subr.mxu0 0.0
    %508 = vmatpush1.msra.mxu0 %v483
    %509 = vmatprep.subr.mxu0 0.0
    %510 = vmatpush1.msra.mxu0 %v484
    %511 = vmatprep.subr.mxu0 0.0
    %512 = vmatpush1.msra.mxu0 %v485
    %513 = vmatprep.subr.mxu0 0.0
    %514 = vmatpush1.msra.mxu0 %v486
    %515 = vmatprep.subr.mxu0 0.0
    %516 = vmatpush1.msra.mxu0 %v487
    %517 = vmatprep.subr.mxu0 0.0
    %518 = vmatpush1.msra.mxu0 %v488
    %519 = vmatprep.subr.mxu0 0.0
    %520 = vmatpush1.msra.mxu0 %v489
    %521 = vmatprep.subr.mxu0 0.0
    %522 = vmatpush1.msra.mxu0 %v490
    %523 = vmatprep.subr.mxu0 0.0
    %524 = vmatpush1.msra.mxu0 0.0
    %525 = vmatprep.subr.mxu0 0.0
    %526 = vmatpush1.msra.mxu0 0.0
    %527 = vmatprep.subr.mxu0 0.0
    %528 = vmatpush1.msra.mxu0 0.0
    %529 = vmatprep.subr.mxu0 0.0
    %530 = vmatpush1.msra.mxu0 0.0
    %531 = vmatprep.subr.mxu0 0.0
    %532 = vmatpush1.msra.mxu0 0.0
    %533 = vmatprep.subr.mxu0 0.0
    %534 = vmatpush1.msra.mxu0 0.0
    %535 = vmatprep.subr.mxu0 0.0
    %536 = vmatpush1.msra.mxu0 0.0
    %537 = vmatprep.subr.mxu0 0.0
    %538 = vmatpush1.msra.mxu0 0.0
    %539 = vmatprep.subr.mxu0 0.0
    %540 = vmatpush1.msra.mxu0 0.0
    %541 = vmatprep.subr.mxu0 0.0
    %542 = vmatpush1.msra.mxu0 0.0
    %543 = vmatprep.subr.mxu0 0.0
    %544 = vmatpush1.msra.mxu0 0.0
    %545 = vmatprep.subr.mxu0 0.0
    %546 = vmatpush1.msra.mxu0 0.0
    %547 = vmatprep.subr.mxu0 0.0
    %548 = vmatpush1.msra.mxu0 0.0
    %549 = vmatprep.subr.mxu0 0.0
    %550 = vmatpush1.msra.mxu0 0.0
    %551 = vmatprep.subr.mxu0 0.0
    %552 = vmatpush1.msra.mxu0 0.0
    %553 = vmatprep.subr.mxu0 0.0
    %554 = vmatpush1.msra.mxu0 0.0
    %555 = vmatprep.mubr.f32.mxu0 0.0
    %556 = vmatmul.mubr.f32.gmra.mrb[0].mxu0 %v473
    %v557 = vpop.f32.mrb[0].mxu0
    %v558 = vadd.f32 0.0, %v557
    %v559 = vpop.f32.mrb[0].mxu0
    %560 = vmatprep.mubr.f32.mxu0 0.0
    %561 = vmatmul.mubr.f32.gmra.mrb[0].mxu0 %v474
    %v562 = vpop.f32.mrb[0].mxu0
    %v563 = vadd.f32 0.0, %v562
    %v564 = vpop.f32.mrb[0].mxu0
    %565 = vdwg.mxu0
    %566 = vst [vmem:[%s4] sm:$0xff] %v558
    %567 = vst [vmem:[%s4 + $0x8] sm:$0xff] %v563
    // Predicated region
    $region22: #{convnet_forward.1} parent=1 // pred_check
      _
    $region23: #{convnet_forward.1} parent=1 // pred_check_branch
      %569 = sbr.rel (0) target = $region25
    $region24: #{convnet_forward.1} parent=1 // pred_region
      _
    $region25: #{convnet_forward.1} parent=1 // pred_fallthru
      _
    // Predicated region
    $region26: #{convnet_forward.1} parent=1 // pred_check
      _
    $region27: #{convnet_forward.1} parent=1 // pred_check_branch
      %571 = sbr.rel (0) target = $region29
    $region28: #{convnet_forward.1} parent=1 // pred_region
      _
    $region29: #{convnet_forward.1} parent=1 // pred_fallthru
      _
    %572 = vsyncpa [#allocation3], 1

</llo_original>
